<compile_context>
chip_gen: v7x
topology: tpu7x:2x2x1
jax: 0.10.0
libtpu: 0.0.40
codegen_flags: <defaults>
</compile_context>

<pallas_src>
import functools
import math

import jax
import jax.numpy as jnp
from jax.experimental import pallas as pl
from jax.experimental.pallas import tpu as pltpu


def _mixer_kernel(w_ref, inv_ref, z_ref, out_ref, *, concat_embed: bool, d: int,
                  use_mxu: bool):
    zf = z_ref[...]                                    # (B, tc) lane-dense tile of flat z
    b, tc = zf.shape

    if use_mxu:
        # Single-pass MXU matmul with the exact 0/1 membership mask (z's native dtype),
        # then an f32 reciprocal-count row scale on the VPU.  HIGH only for f32 inputs.
        prec = jax.lax.Precision.HIGH if zf.dtype == jnp.float32 else None
        aggr32 = jnp.dot(w_ref[...], zf,
                         preferred_element_type=jnp.float32, precision=prec)
        aggr32 = aggr32 * inv_ref[...]                 # (B, tc) * (B, 1)
    else:
        # Small-B path: exact f32 weighted sum over the B rows on the VPU (MXU would be
        # nearly all padding at B << 128, and this sidesteps any precision flag entirely).
        wf = w_ref[...] * inv_ref[...]                 # (B, B) f32, tiny
        zf32 = zf.astype(jnp.float32)
        aggr32 = wf[:, 0:1] * zf32[0:1, :]
        for c in range(1, b):                          # static, bounded by B <= 16
            aggr32 = aggr32 + wf[:, c:c + 1] * zf32[c:c + 1, :]

    aggr = aggr32.astype(out_ref.dtype)

    if concat_embed:
        # One vectorized interleave at D granularity -> single dense (B, 2*tc) store.
        nt = tc // d
        inter = jnp.concatenate(
            [zf.reshape(b, nt, d), aggr.reshape(b, nt, d)], axis=-1)
        out_ref[...] = inter.reshape(b, 2 * tc)
    else:
        # Sublane interleave: row 2b = z[b], row 2b+1 = aggr[b] -> single dense (2B, tc) store.
        out_ref[...] = jnp.stack([zf, aggr], axis=1).reshape(2 * b, tc)


def _round_up(x, m):
    return ((x + m - 1) // m) * m


def _tile_vmem_bytes(b, tc, itemsize, concat_embed):
    """Footprint model: double-buffered in/out blocks + f32 compute temporaries + padding."""
    rows_in = _round_up(b, 8)                          # sublane padding of the z tile
    in_bytes = rows_in * tc * itemsize
    if concat_embed:
        out_bytes = rows_in * 2 * tc * itemsize
    else:
        out_bytes = _round_up(2 * b, 8) * tc * itemsize
    pipeline = 2 * (in_bytes + out_bytes)              # Pallas double-buffers each block
    temporaries = 4 * rows_in * tc * 4                 # f32 cast / aggregate / interleave slack
    return pipeline + temporaries


def _pick_tile_cols(nd, d, b, itemsize, concat_embed, budget):
    """Largest lane-aligned column tile dividing N*D that fits the budget, preferring >=4 steps."""
    unit = (128 * d) // math.gcd(128, d) if concat_embed else 128
    if nd <= unit or nd % unit != 0:
        return nd                                      # whole row (full-dim block is legal)
    divisors = [c for c in range(unit, nd, unit) if nd % c == 0]
    if not divisors:
        return nd
    divisors.sort(reverse=True)
    for min_steps in (4, 2, 1):                        # pipelining / megacore first
        for tc in divisors:
            if nd // tc >= min_steps and _tile_vmem_bytes(b, tc, itemsize, concat_embed) <= budget:
                return tc
    return divisors[-1]                                # smallest aligned tile; vmem_limit covers it


def _vmem_budget():
    """Generation-aware (budget for tile footprint, vmem_limit_bytes for the compiler)."""
    phys = 64 * 1024 * 1024                            # conservative default (v7x-sized)
    try:
        info = pltpu.get_tpu_info()
        phys = int(getattr(info, "vmem_capacity_bytes", None) or phys)
    except Exception:
        pass
    tile_budget = min(phys // 4, 24 * 1024 * 1024)     # 16 MiB on v7x, 24 MiB on v5e/v6e
    vmem_limit = min(phys // 2, 48 * 1024 * 1024)      # headroom for compiler scratch
    return tile_budget, vmem_limit


def channel_latent_mixer(z, ch_ids, reduction="mean", combination="concat_patch_dim"):
    """Pallas equivalent of ChannelLatentMixer.forward.

    z:      (B, 1, N, D)
    ch_ids: (B,) positive integer channel ids
    """
    zs = jnp.squeeze(z, axis=1)                                   # (B, N, D)
    B, N, D = zs.shape

    ids = ch_ids.astype(jnp.int32)
    mask = (ids[:, None] == ids[None, :]).astype(jnp.float32)     # (B, B) 0/1 membership
    counts = jnp.sum(mask, axis=1, keepdims=True)                 # (B, 1)
    if reduction == "mean":
        inv = 1.0 / counts
    elif reduction == "sum":
        inv = jnp.ones_like(counts)
    else:
        raise ValueError("Invalid reduction method. Choose between 'mean' or 'sum'.")

    if combination == "concat_embed_dim":
        concat_embed = True
    elif combination == "concat_patch_dim":
        concat_embed = False
    else:
        raise ValueError(
            "Invalid combination method. Choose between 'concat_embed_dim' or 'concat_patch_dim'."
        )

    nd = N * D
    zf = zs.reshape(B, nd)                                        # contiguous flatten (free)
    itemsize = jnp.dtype(zs.dtype).itemsize

    use_mxu = B > 16
    w = mask.astype(zs.dtype) if use_mxu else mask                # 0/1 mask; f32 on VPU path

    tile_budget, vmem_limit = _vmem_budget()
    tc = _pick_tile_cols(nd, D, B, itemsize, concat_embed, tile_budget)
    assert nd % tc == 0
    grid = (nd // tc,)

    if concat_embed:
        out_flat_shape = (B, 2 * nd)
        out_spec = pl.BlockSpec((B, 2 * tc), lambda i: (0, i))
    else:
        out_flat_shape = (2 * B, nd)
        out_spec = pl.BlockSpec((2 * B, tc), lambda i: (0, i))

    kernel = functools.partial(_mixer_kernel, concat_embed=concat_embed, d=D,
                               use_mxu=use_mxu)

    cost = pl.CostEstimate(
        flops=2 * B * B * nd,
        transcendentals=0,
        bytes_accessed=3 * B * nd * itemsize,
    )

    out_flat = pl.pallas_call(
        kernel,
        out_shape=jax.ShapeDtypeStruct(out_flat_shape, zs.dtype),
        grid=grid,
        in_specs=[
            pl.BlockSpec((B, B), lambda i: (0, 0)),               # 0/1 group mask (VMEM-resident)
            pl.BlockSpec((B, 1), lambda i: (0, 0)),               # f32 reciprocal counts / ones
            pl.BlockSpec((B, tc), lambda i: (0, i)),              # streamed z column tiles
        ],
        out_specs=out_spec,
        compiler_params=pltpu.CompilerParams(
            dimension_semantics=("parallel",),
            vmem_limit_bytes=vmem_limit,
        ),
        cost_estimate=cost,
    )(w, inv, zf)

    if concat_embed:
        return out_flat.reshape(B, N, 2 * D)
    return out_flat.reshape(B, 2 * N, D)


def reference(z, ch_ids, reduction="mean", combination="concat_patch_dim"):
    """Pure-JAX reference matching the PyTorch semantics."""
    zs = jnp.squeeze(z, axis=1)
    ids = ch_ids.astype(jnp.int32)
    mask = (ids[:, None] == ids[None, :]).astype(jnp.float32)
    w = mask / jnp.sum(mask, axis=1, keepdims=True) if reduction == "mean" else mask
    aggr = jnp.einsum(
        "bc,cnd->bnd", w, zs.astype(jnp.float32),
        precision=jax.lax.Precision.HIGHEST,
    ).astype(zs.dtype)
    axis = -1 if combination == "concat_embed_dim" else -2
    return jnp.concatenate([zs, aggr], axis=axis)


if __name__ == "__main__":
    key = jax.random.PRNGKey(0)
    B, N, D = 4, 8, 32
    z = jax.random.normal(key, (B, 1, N, D), dtype=jnp.float32)
    # positive integer channel ids; two groups: {0, 2} and {1, 3}
    ch_ids = jnp.array([1, 2, 1, 2], dtype=jnp.int32)

    for combination in ("concat_patch_dim", "concat_embed_dim"):
        for reduction in ("mean", "sum"):
            out = channel_latent_mixer(z, ch_ids, reduction=reduction, combination=combination)
            out = jax.block_until_ready(out)
            ref = reference(z, ch_ids, reduction, combination)
            assert out.shape == ref.shape, (out.shape, ref.shape)
            assert jnp.allclose(out, ref, atol=1e-4, rtol=1e-4), (combination, reduction)

    print("KERNEL_OK")
</pallas_src>

<mosaic_0001>
module attributes {stable_mosaic.version = 11 : i64} {
  func.func @_mixer_kernel(%arg0: i32, %arg1: memref<4x4xf32, #tpu.memory_space<vmem>>, %arg2: memref<4x1xf32, #tpu.memory_space<vmem>>, %arg3: memref<4x128xf32, #tpu.memory_space<vmem>>, %arg4: memref<8x128xf32, #tpu.memory_space<vmem>>) attributes {dimension_semantics = [#tpu.dimension_semantics<parallel>], iteration_bounds = array<i64: 2>, scalar_prefetch = 0 : i64, scratch_operands = 0 : i64, tpu.core_type = #tpu.core_type<tc>, window_params = [{pipeline_mode = #tpu.pipeline_mode<synchronous>, transform_indices = @transform_0, window_bounds = array<i64: 4, 4>}, {pipeline_mode = #tpu.pipeline_mode<synchronous>, transform_indices = @transform_1, window_bounds = array<i64: 4, 1>}, {transform_indices = @transform_2, window_bounds = array<i64: 4, 128>}, {transform_indices = @transform_3, window_bounds = array<i64: 8, 128>}]} {
    %c0 = arith.constant 0 : index
    %c0_0 = arith.constant 0 : index
    %0 = vector.load %arg3[%c0, %c0_0] : memref<4x128xf32, #tpu.memory_space<vmem>>, vector<4x128xf32>
    %c0_1 = arith.constant 0 : index
    %c0_2 = arith.constant 0 : index
    %1 = vector.load %arg1[%c0_1, %c0_2] : memref<4x4xf32, #tpu.memory_space<vmem>>, vector<4x4xf32>
    %c0_3 = arith.constant 0 : index
    %c0_4 = arith.constant 0 : index
    %2 = vector.load %arg2[%c0_3, %c0_4] : memref<4x1xf32, #tpu.memory_space<vmem>>, vector<4x1xf32>
    %3 = vector.broadcast %2 : vector<4x1xf32> to vector<4x4xf32>
    %4 = arith.mulf %1, %3 : vector<4x4xf32>
    %5 = vector.extract_strided_slice %4 {offsets = [0, 0], sizes = [4, 1], strides = [1, 1]} : vector<4x4xf32> to vector<4x1xf32>
    %6 = vector.extract_strided_slice %0 {offsets = [0, 0], sizes = [1, 128], strides = [1, 1]} : vector<4x128xf32> to vector<1x128xf32>
    %7 = vector.broadcast %5 : vector<4x1xf32> to vector<4x128xf32>
    %8 = vector.broadcast %6 : vector<1x128xf32> to vector<4x128xf32>
    %9 = arith.mulf %7, %8 : vector<4x128xf32>
    %10 = vector.extract_strided_slice %4 {offsets = [0, 1], sizes = [4, 1], strides = [1, 1]} : vector<4x4xf32> to vector<4x1xf32>
    %11 = vector.extract_strided_slice %0 {offsets = [1, 0], sizes = [1, 128], strides = [1, 1]} : vector<4x128xf32> to vector<1x128xf32>
    %12 = vector.broadcast %10 : vector<4x1xf32> to vector<4x128xf32>
    %13 = vector.broadcast %11 : vector<1x128xf32> to vector<4x128xf32>
    %14 = arith.mulf %12, %13 : vector<4x128xf32>
    %15 = arith.addf %9, %14 : vector<4x128xf32>
    %16 = vector.extract_strided_slice %4 {offsets = [0, 2], sizes = [4, 1], strides = [1, 1]} : vector<4x4xf32> to vector<4x1xf32>
    %17 = vector.extract_strided_slice %0 {offsets = [2, 0], sizes = [1, 128], strides = [1, 1]} : vector<4x128xf32> to vector<1x128xf32>
    %18 = vector.broadcast %16 : vector<4x1xf32> to vector<4x128xf32>
    %19 = vector.broadcast %17 : vector<1x128xf32> to vector<4x128xf32>
    %20 = arith.mulf %18, %19 : vector<4x128xf32>
    %21 = arith.addf %15, %20 : vector<4x128xf32>
    %22 = vector.extract_strided_slice %4 {offsets = [0, 3], sizes = [4, 1], strides = [1, 1]} : vector<4x4xf32> to vector<4x1xf32>
    %23 = vector.extract_strided_slice %0 {offsets = [3, 0], sizes = [1, 128], strides = [1, 1]} : vector<4x128xf32> to vector<1x128xf32>
    %24 = vector.broadcast %22 : vector<4x1xf32> to vector<4x128xf32>
    %25 = vector.broadcast %23 : vector<1x128xf32> to vector<4x128xf32>
    %26 = arith.mulf %24, %25 : vector<4x128xf32>
    %27 = arith.addf %21, %26 : vector<4x128xf32>
    %28 = vector.shape_cast %0 : vector<4x128xf32> to vector<4x1x128xf32>
    %29 = vector.shape_cast %27 : vector<4x128xf32> to vector<4x1x128xf32>
    %30 = tpu.concatenate %28, %29 in 1 : vector<4x1x128xf32>, vector<4x1x128xf32> -> vector<4x2x128xf32>
    %31 = vector.shape_cast %30 : vector<4x2x128xf32> to vector<8x128xf32>
    %c0_5 = arith.constant 0 : index
    %c0_6 = arith.constant 0 : index
    %32 = vector.load %arg4[%c0_5, %c0_6] : memref<8x128xf32, #tpu.memory_space<vmem>>, vector<8x128xf32>
    tpu.vector_store %arg4[%c0_5, %c0_6], %31 {strides = array<i32>} : memref<8x128xf32, #tpu.memory_space<vmem>>, vector<8x128xf32>,
    return
  }
  func.func @transform_0(%arg0: i32) -> (i32, i32) {
    %c0_i32 = arith.constant 0 : i32
    %c0_i32_0 = arith.constant 0 : i32
    %c0_i32_1 = arith.constant 0 : i32
    return %c0_i32, %c0_i32_0 : i32, i32
  }
  func.func @transform_1(%arg0: i32) -> (i32, i32) {
    %c0_i32 = arith.constant 0 : i32
    %c0_i32_0 = arith.constant 0 : i32
    %c0_i32_1 = arith.constant 0 : i32
    return %c0_i32, %c0_i32_0 : i32, i32
  }
  func.func @transform_2(%arg0: i32) -> (i32, i32) {
    %c0_i32 = arith.constant 0 : i32
    %c0_i32_0 = arith.constant 0 : i32
    return %c0_i32, %arg0 : i32, i32
  }
  func.func @transform_3(%arg0: i32) -> (i32, i32) {
    %c0_i32 = arith.constant 0 : i32
    %c0_i32_0 = arith.constant 0 : i32
    return %c0_i32, %arg0 : i32, i32
  }
}

</mosaic_0001>

<llo_original>
// kernel: tpu_custom_call.1
$region0: #{tpu_custom_call.1}
  #allocation0 [shape = 'u32[]', space=smem, size = 0x4, offset = 0x4, fixed_abs, tag = 'smem constant byte address 0x4 - core index']
  #allocation1 [shape = 'u32[144,128]{1,0:T(1,128)}', space=vmem, size = 0x12000, scoped, tag = 'internal scratch']
  %s0 = inlined_call_operand.vmem [shape: f32[4,4], index: 0, kind: input, shape index: {}]
  %s1 = inlined_call_operand.vmem [shape: f32[4,1], index: 1, kind: input, shape index: {}]
  %s2 = inlined_call_operand.vmem [shape: f32[4,256], index: 2, kind: input, shape index: {}]
  %s3 = inlined_call_operand.hbm [shape: f32[8,256], index: 3, kind: output, shape index: {}]
  %s4 = sld [smem:[#allocation0]]
  $region45: #{tpu_custom_call.1} parent=0
    _
  %s6 = ssub.s32 1, %s4
  %s7 = scalar_select 0, %s6, %s4
  $region1: #{tpu_custom_call.1} parent=0
    #allocation2 [shape = 'u8[8192]{0}', space=vmem, size = 0x2000, scoped, tag = 'output window, operand 0']
    #allocation3 [shape = 's32[2]{0}', space=sflag, size = 0x8, scoped, tag = 'scoped memory for tpu_custom_call.1']
    %8 = vsyncpa [#allocation3], 0
    %s9 = scalar_lea.sflag [#allocation3], 1
    %10 = vsyncpa %s9, 0
    loop: start=0, step=1, limit=4
    $region2: #{tpu_custom_call.1} parent=1 // loop_pre_header
      _
    $region3: #{tpu_custom_call.1} parent=1 // loop_header
      %s12 = sphi 0, %s16
      %p13 = scmp.ge.s32.totalorder %s12, 4
      %s20 = sphi 0, %s20
      %s22 = sphi 0, %s20
      %s23 = sphi 0, %s22
      %s37 = sphi 0, %s23
      %s41 = sphi 0, %s41
      %s43 = sphi 0, %s41
      %s44 = sphi 0, %s43
      %s58 = sphi 0, %s44
      %s64 = sphi 0, %s66
      %s67 = sphi 0, %s64
      %s68 = sphi 0, %s67
      %s84 = sphi 0, %s68
      %s90 = sphi 0, %s92
      %s93 = sphi 0, %s90
      %s94 = sphi 0, %s93
      %s110 = sphi 0, %s94
    $region4: #{tpu_custom_call.1} parent=1 // loop_header_branch
      %15 = sbr.rel (%p13) target = $region8
    $region5: #{tpu_custom_call.1} parent=1 // loop_body
      %s17 = ssub.s32 %s12, 1
      %s18 = ssub.s32 %s12, 2
      %s19 = sadd.s32 %s12, 1
      %s21 = sadd.s32 %s20, 1
      %p24 = scmp.eq.s32.totalorder %s12, 1
      %p25 = scmp.ne.s32.totalorder %s20, %s22
      %p26 = scmp.eq.s32.totalorder %s12, 0
      %p27 = por %p25, %p26
      %p28 = scmp.ne.s32.totalorder %s20, %s22
      %p29 = scmp.eq.s32.totalorder %s17, 1
      %p30 = por %p28, %p29
      %p31 = scmp.ne.s32.totalorder %s22, %s23
      %p32 = scmp.eq.s32.totalorder %s17, 0
      %p33 = por %p31, %p32
      %p34 = scmp.ne.s32.totalorder %s22, %s23
      %p35 = scmp.eq.s32.totalorder %s18, 1
      %p36 = por %p34, %p35
      %p38 = scmp.ne.s32.totalorder %s23, %s37
      %p39 = scmp.eq.s32.totalorder %s18, 0
      %p40 = por %p38, %p39
      %s42 = sadd.s32 %s41, 1
      %p45 = scmp.eq.s32.totalorder %s12, 1
      %p46 = scmp.ne.s32.totalorder %s41, %s43
      %p47 = scmp.eq.s32.totalorder %s12, 0
      %p48 = por %p46, %p47
      %p49 = scmp.ne.s32.totalorder %s41, %s43
      %p50 = scmp.eq.s32.totalorder %s17, 1
      %p51 = por %p49, %p50
      %p52 = scmp.ne.s32.totalorder %s43, %s44
      %p53 = scmp.eq.s32.totalorder %s17, 0
      %p54 = por %p52, %p53
      %p55 = scmp.ne.s32.totalorder %s43, %s44
      %p56 = scmp.eq.s32.totalorder %s18, 1
      %p57 = por %p55, %p56
      %p59 = scmp.ne.s32.totalorder %s44, %s58
      %p60 = scmp.eq.s32.totalorder %s18, 0
      %p61 = por %p59, %p60
      %s62 = ssub.s32 %s12, %s19
      %p63 = scmp.eq.s32.totalorder %s62, 0
      %s65 = sadd.s32 %s64, 1
      %s66 = scalar_select %p63, %s64, %s65
      %p69 = pneg %p63
      %p70 = scmp.eq.s32.totalorder %s12, 1
      %p71 = por %p69, %p70
      %p72 = scmp.ne.s32.totalorder %s64, %s67
      %p73 = scmp.eq.s32.totalorder %s12, 0
      %p74 = por %p72, %p73
      %p75 = scmp.ne.s32.totalorder %s64, %s67
      %p76 = scmp.eq.s32.totalorder %s17, 1
      %p77 = por %p75, %p76
      %p78 = scmp.ne.s32.totalorder %s67, %s68
      %p79 = scmp.eq.s32.totalorder %s17, 0
      %p80 = por %p78, %p79
      %p81 = scmp.ne.s32.totalorder %s67, %s68
      %p82 = scmp.eq.s32.totalorder %s18, 1
      %p83 = por %p81, %p82
      %p85 = scmp.ne.s32.totalorder %s68, %s84
      %p86 = scmp.eq.s32.totalorder %s18, 0
      %p87 = por %p85, %p86
      %s88 = ssub.s32 %s12, %s19
      %p89 = scmp.eq.s32.totalorder %s88, 0
      %s91 = sadd.s32 %s90, 1
      %s92 = scalar_select %p89, %s90, %s91
      %p95 = pneg %p89
      %p96 = scmp.eq.s32.totalorder %s12, 1
      %p97 = por %p95, %p96
      %p98 = scmp.ne.s32.totalorder %s90, %s93
      %p99 = scmp.eq.s32.totalorder %s12, 0
      %p100 = por %p98, %p99
      %p101 = scmp.ne.s32.totalorder %s90, %s93
      %p102 = scmp.eq.s32.totalorder %s17, 1
      %p103 = por %p101, %p102
      %p104 = scmp.ne.s32.totalorder %s93, %s94
      %p105 = scmp.eq.s32.totalorder %s17, 0
      %p106 = por %p104, %p105
      %p107 = scmp.ne.s32.totalorder %s93, %s94
      %p108 = scmp.eq.s32.totalorder %s18, 1
      %p109 = por %p107, %p108
      %p111 = scmp.ne.s32.totalorder %s94, %s110
      %p112 = scmp.eq.s32.totalorder %s18, 0
      %p113 = por %p111, %p112
      %p114 = scmp.le.s32.totalorder 1, %s12
      %p115 = scmp.lt.s32.totalorder %s12, 3
      %p116 = pnand %p114, %p115
      %p117 = pneg %p116
      // Predicated region
      $region9: #{tpu_custom_call.1} parent=5 // pred_check
        _
      $region10: #{tpu_custom_call.1} parent=5 // pred_check_branch
        %119 = sbr.rel (%p116) target = $region12
      $region11: #{tpu_custom_call.1} parent=5 // pred_region
        %s120 = ssub.s32 %s12, 1
        // Predicated region
        $region13: #{tpu_custom_call.1} parent=11 // pred_check
          %p121 = pneg %p33
        $region14: #{tpu_custom_call.1} parent=11 // pred_check_branch
          %123 = sbr.rel (%p121) target = $region16
        $region15: #{tpu_custom_call.1} parent=11 // pred_region
          _
        $region16: #{tpu_custom_call.1} parent=11 // pred_fallthru
          _
        // Predicated region
        $region17: #{tpu_custom_call.1} parent=11 // pred_check
          %p124 = pneg %p54
        $region18: #{tpu_custom_call.1} parent=11 // pred_check_branch
          %126 = sbr.rel (%p124) target = $region20
        $region19: #{tpu_custom_call.1} parent=11 // pred_region
          _
        $region20: #{tpu_custom_call.1} parent=11 // pred_fallthru
          _
      $region12: #{tpu_custom_call.1} parent=5 // pred_fallthru
        _
      %p127 = scmp.lt.s32.totalorder %s12, 2
      // Predicated region
      $region21: #{tpu_custom_call.1} parent=5 // pred_check
        %p128 = pneg %p127
      $region22: #{tpu_custom_call.1} parent=5 // pred_check_branch
        %130 = sbr.rel (%p128) target = $region24
      $region23: #{tpu_custom_call.1} parent=5 // pred_region
        // Predicated region
        $region25: #{tpu_custom_call.1} parent=23 // pred_check
          %p131 = pneg %p74
        $region26: #{tpu_custom_call.1} parent=23 // pred_check_branch
          %133 = sbr.rel (%p131) target = $region28
        $region27: #{tpu_custom_call.1} parent=23 // pred_region
          %p134 = scmp.lt.s32.totalorder %s12, 1
          %s135 = scalar_select %p134, %s12, 1
          %s136 = smul.addr %s135, 4
          %s137 = scalar_lea.vmem %s2, %s136
        $region28: #{tpu_custom_call.1} parent=23 // pred_fallthru
          _
      $region24: #{tpu_custom_call.1} parent=5 // pred_fallthru
        _
      %p138 = scmp.le.s32.totalorder 1, %s12
      %p139 = scmp.lt.s32.totalorder %s12, 3
      %p140 = pnand %p138, %p139
      %p141 = pneg %p140
      // Predicated region
      $region29: #{tpu_custom_call.1} parent=5 // pred_check
        _
      $region30: #{tpu_custom_call.1} parent=5 // pred_check_branch
        %143 = sbr.rel (%p140) target = $region32
      $region31: #{tpu_custom_call.1} parent=5 // pred_region
        %s144 = ssub.s32 %s12, 1
        %p145 = pneg %p33
        %p146 = pneg %p30
        %p147 = pneg %p54
        %p148 = pneg %p51
        %p149 = scmp.lt.s32.totalorder %s17, 1
        %s150 = scalar_select %p149, %s17, 1
        %s151 = smul.addr %s150, 4
        %s152 = scalar_lea.vmem %s2, %s151
        %p153 = pneg %p80
        %p154 = pneg %p77
        %p155 = pneg %p106
        %p156 = pneg %p103
        %s157 = sand.u32 %s93, 1
        %s158 = scalar_lea.sflag [#allocation3], %s157
        %s159 = sand.u32 %s93, 1
        %s160 = smul.addr %s159, 8
        %s161 = scalar_lea.vmem [#allocation2], %s160
        %p162 = scmp.lt.s32.totalorder %s17, 1
        %s163 = scalar_select %p162, %s17, 1
        %s164 = smul.addr %s163, 4
        %s165 = scalar_lea.vmem %s2, %s164
        %v166 = vld [vmem:[%s165] sm:$0xf]
        %v167 = vld [vmem:[%s0] sm:$0xf]
        %v168 = vld [vmem:[%s1] sm:$0xf]
        %170 = vset.pattern.permute.xlu0 0
        %171 = vperm.xlu0 %170, %v168
        %v172 = vpop.permute.xlu0 %171
        %v174 = vmul.f32 %v167, %v172
        %176 = vset.pattern.permute.xlu0 0
        %177 = vperm.xlu0 %176, %v174
        %v178 = vpop.permute.xlu0 %177
        %v180 = vlaneseq
        %v181 = vshrl.u32 %v180, 7
        %v182 = vsub.s32 0, %v181
        %v183 = vrot.slane %v166, %v182
        %v184 = vmul.f32 %v178, %v183
        %185 = vset.pattern.permute.xlu0 1
        %186 = vperm.xlu0 %185, %v174
        %v187 = vpop.permute.xlu0 %186
        %v189 = vlaneseq
        %v190 = vshrl.u32 %v189, 7
        %v191 = vsub.s32 1, %v190
        %v192 = vrot.slane %v166, %v191
        %v193 = vmul.f32 %v187, %v192
        %v194 = vadd.f32 %v184, %v193
        %195 = vset.pattern.permute.xlu0 2
        %196 = vperm.xlu0 %195, %v174
        %v197 = vpop.permute.xlu0 %196
        %v199 = vlaneseq
        %v200 = vshrl.u32 %v199, 7
        %v201 = vsub.s32 2, %v200
        %v202 = vrot.slane %v166, %v201
        %v203 = vmul.f32 %v197, %v202
        %v204 = vadd.f32 %v194, %v203
        %205 = vset.pattern.permute.xlu0 3
        %206 = vperm.xlu0 %205, %v174
        %v207 = vpop.permute.xlu0 %206
        %v209 = vlaneseq
        %v210 = vshrl.u32 %v209, 7
        %v211 = vsub.s32 3, %v210
        %v212 = vrot.slane %v166, %v211
        %v213 = vmul.f32 %v207, %v212
        %v214 = vadd.f32 %v204, %v213
        %v217 = vunpack.c.l.s4 1966171168
        %v218 = vunpack.c.0.s8 %v217
        %v219 = vlaneseq
        %v220 = vshrl.u32 %v219, 7
        %v221 = vsub.s32 %v218, %v220
        %v222 = vrot.slane %v166, %v221
        %v223 = vcombine.high %v222, %v222
        %v225 = vunpack.c.l.s4 1966171168
        %v226 = vunpack.c.0.s8 %v225
        %v227 = vlaneseq
        %v228 = vshrl.u32 %v227, 7
        %v229 = vsub.s32 %v226, %v228
        %v230 = vrot.slane %v222, %v229
        %v232 = vunpack.c.l.s4 1966171168
        %v233 = vunpack.c.0.s8 %v232
        %v234 = vlaneseq
        %v235 = vshrl.u32 %v234, 7
        %v236 = vsub.s32 %v233, %v235
        %v237 = vrot.slane %v223, %v236
        %v238 = vcombine.high %v230, %v230
        %v239 = vcombine.high %v237, %v237
        %v246 = vunpack.c.l.s4 1966171168
        %v247 = vunpack.c.0.s8 %v246
        %v248 = vlaneseq
        %v249 = vshrl.u32 %v248, 7
        %v250 = vsub.s32 %v247, %v249
        %v251 = vrot.slane %v214, %v250
        %v252 = vcombine.high %v251, %v251
        %v254 = vunpack.c.l.s4 1966171168
        %v255 = vunpack.c.0.s8 %v254
        %v256 = vlaneseq
        %v257 = vshrl.u32 %v256, 7
        %v258 = vsub.s32 %v255, %v257
        %v259 = vrot.slane %v251, %v258
        %v261 = vunpack.c.l.s4 1966171168
        %v262 = vunpack.c.0.s8 %v261
        %v263 = vlaneseq
        %v264 = vshrl.u32 %v263, 7
        %v265 = vsub.s32 %v262, %v264
        %v266 = vrot.slane %v252, %v265
        %v267 = vcombine.high %v259, %v259
        %v268 = vcombine.high %v266, %v266
        %v269 = vlaneseq
        %v270 = vshrl.u32 %v269, 7
        %v271 = vsub.s32 0, %v270
        %v272 = vrot.slane %v259, %v271
        %v273 = vlaneseq
        %v274 = vshrl.u32 %v273, 7
        %v275 = vsub.s32 0, %v274
        %v276 = vrot.slane %v266, %v275
        %v277 = vlaneseq
        %v278 = vshrl.u32 %v277, 7
        %v279 = vsub.s32 0, %v278
        %v280 = vrot.slane %v267, %v279
        %v281 = vlaneseq
        %v282 = vshrl.u32 %v281, 7
        %v283 = vsub.s32 0, %v282
        %v284 = vrot.slane %v268, %v283
        %vm289 = vcmask 1040384
        %v290 = vsel %vm289, %v230, %v272
        %v291 = vsel %vm289, %v237, %v276
        %v292 = vsel %vm289, %v238, %v280
        %v293 = vsel %vm289, %v239, %v284
        %v298 = vcombine.low %v290, %v291
        %v299 = vcombine.low %v292, %v293
        %v301 = vunpack.c.l.s4 1983009808
        %v302 = vunpack.c.0.s8 %v301
        %v303 = vlaneseq
        %v304 = vshrl.u32 %v303, 7
        %v305 = vsub.s32 %v302, %v304
        %v306 = vrot.slane %v298, %v305
        %v308 = vunpack.c.l.s4 1983009808
        %v309 = vunpack.c.0.s8 %v308
        %v310 = vlaneseq
        %v311 = vshrl.u32 %v310, 7
        %v312 = vsub.s32 %v309, %v311
        %v313 = vrot.slane %v299, %v312
        %v314 = vcombine.low %v306, %v313
        %316 = vst [vmem:[%s161] sm:$0xff] %v314
        %s317 = sand.u32 %s93, 1
        %s318 = scalar_lea.sflag [#allocation3], %s317
        %s319 = sand.u32 %s93, 1
        %s320 = smul.addr %s319, 8
        %s321 = scalar_lea.vmem [#allocation2], %s320
        // Predicated region
        $region33: #{tpu_custom_call.1} parent=31 // pred_check
          %p322 = pneg %p103
        $region34: #{tpu_custom_call.1} parent=31 // pred_check_branch
          %324 = sbr.rel (%p322) target = $region36
        $region35: #{tpu_custom_call.1} parent=31 // pred_region
          %s326 = ssub.s32 128, 128
          %327 = vsyncadd %s318, %s326
          %s328 = smul.addr %s17, 128
          %s329 = scalar_lea.hbm %s3, %s328
          %s331 = sshll.u32 %s321, 4
          %s332 = int_to_ptr.vmem [resolvable:$true] %s331
          %334 = dma.vmem_to_hbm [thread:$0]  %s332, 128, %s329, %s318
        $region36: #{tpu_custom_call.1} parent=31 // pred_fallthru
          _
      $region32: #{tpu_custom_call.1} parent=5 // pred_fallthru
        _
      %p335 = scmp.le.s32.totalorder 2, %s12
      // Predicated region
      $region37: #{tpu_custom_call.1} parent=5 // pred_check
        %p336 = pneg %p335
      $region38: #{tpu_custom_call.1} parent=5 // pred_check_branch
        %338 = sbr.rel (%p336) target = $region40
      $region39: #{tpu_custom_call.1} parent=5 // pred_region
        %s339 = ssub.s32 %s12, 2
        // Predicated region
        $region41: #{tpu_custom_call.1} parent=39 // pred_check
          %p340 = pneg %p109
        $region42: #{tpu_custom_call.1} parent=39 // pred_check_branch
          %342 = sbr.rel (%p340) target = $region44
        $region43: #{tpu_custom_call.1} parent=39 // pred_region
          %s343 = sand.u32 %s94, 1
          %s344 = scalar_lea.sflag [#allocation3], %s343
          %s345 = sand.u32 %s94, 1
          %s346 = smul.addr %s345, 8
          %s347 = scalar_lea.vmem [#allocation2], %s346
          %348 = dma.done %s344, 128
        $region44: #{tpu_custom_call.1} parent=39 // pred_fallthru
          _
      $region40: #{tpu_custom_call.1} parent=5 // pred_fallthru
        _
    $region6: #{tpu_custom_call.1} parent=1 // loop_footer
      %s16 = sadd.s32 1, %s12
    $region7: #{tpu_custom_call.1} parent=1 // loop_footer_branch
      %11 = sbr.rel target = $region3
    $region8: #{tpu_custom_call.1} parent=1 // loop_exit
      _
    %349 = vsyncpa [#allocation3], 1
    %s350 = scalar_lea.sflag [#allocation3], 1
    %351 = vsyncpa %s350, 1

</llo_original>
